<compile_context>
chip_gen: v6e
topology: v6e:2x2x1
jax: 0.10.0
libtpu: 0.0.40
codegen_flags: <defaults>
</compile_context>

<pallas_src>
import functools
import math

import jax
import jax.numpy as jnp
from jax.experimental import pallas as pl
from jax.experimental.pallas import tpu as pltpu

_LANE = 128
_MIN_BLK_BOXES = 8 * _LANE      # 1024 boxes  -> minimum (8, 128) tile
_MAX_BLK_BOXES = 256 * _LANE    # 32768 boxes -> ~1.7 MiB inputs per block
_BBOX_XFORM_CLIP = math.log(1000.0 / 16.0)


def _round_up(x, m):
    return (x + m - 1) // m * m


def _giou_partial_kernel(n_total, n_blk,
                         pred_ref, target_ref, anchor_ref, weight_ref,
                         out_ref):
    """One grid step: n_blk boxes -> (24, 128) VPU partial sums.

    pred/target/anchor refs: (4, s_blk, 128) component planes (dx,dy,dw,dh /
    x1,y1,x2,y2).  weight ref: (s_blk, 128).
    out ref: (24, 128) = [weighted-sum | plain-sum | weight-sum] x (8, 128).
    """
    s_blk = pred_ref.shape[1]
    lane = pred_ref.shape[2]

    anc = anchor_ref[...]
    aw = anc[2] - anc[0]
    ah = anc[3] - anc[1]
    acx = anc[0] + 0.5 * aw
    acy = anc[1] + 0.5 * ah

    def decode(d_ref):
        d = d_ref[...]
        cx = d[0] * aw + acx
        cy = d[1] * ah + acy
        bw = jnp.exp(jnp.minimum(d[2], _BBOX_XFORM_CLIP)) * aw
        bh = jnp.exp(jnp.minimum(d[3], _BBOX_XFORM_CLIP)) * ah
        hw = 0.5 * bw
        hh = 0.5 * bh
        # bw, bh >= 0 for valid anchors, so the reference's x2 = max(x1, x2)
        # clamp is a no-op and the box area equals bw * bh directly.
        return cx - hw, cy - hh, cx + hw, cy + hh, bw * bh

    px1, py1, px2, py2, p_area = decode(pred_ref)
    tx1, ty1, tx2, ty2, t_area = decode(target_ref)

    # Intersection (equivalent to the masked-zero form in the reference).
    iw = jnp.maximum(jnp.minimum(px2, tx2) - jnp.maximum(px1, tx1), 0.0)
    ih = jnp.maximum(jnp.minimum(py2, ty2) - jnp.maximum(py1, ty1), 0.0)
    area_i = iw * ih

    # Smallest enclosing box.
    ew = jnp.maximum(px2, tx2) - jnp.minimum(px1, tx1)
    eh = jnp.maximum(py2, ty2) - jnp.minimum(py1, ty1)
    area_e = ew * eh + 1e-7

    area_u = p_area + t_area - area_i + 1e-7

    # 1 - giou = 1 - iou + (area_e - area_u) / area_e
    #          = 2 - area_i / area_u - area_u / area_e
    losses = (2.0
              - area_i * pl.reciprocal(area_u, approx=True)
              - area_u * pl.reciprocal(area_e, approx=True))

    # Mask lanes past n_total (the last block may be zero-padded).
    base = pl.program_id(0) * n_blk
    sub = jax.lax.broadcasted_iota(jnp.int32, (s_blk, lane), 0)
    ln = jax.lax.broadcasted_iota(jnp.int32, (s_blk, lane), 1)
    valid = ((base + sub * lane + ln) < n_total).astype(jnp.float32)

    w = weight_ref[...] * valid
    losses = losses * valid

    # Pure-VPU partial reduction to (8, 128); the cross-lane reduction is done
    # once in JAX on the tiny partials array.
    def fold8(x):
        return jnp.sum(x.reshape(s_blk // 8, 8, lane), axis=0)

    out_ref[0:8, :] = fold8(losses * w)
    out_ref[8:16, :] = fold8(losses)
    out_ref[16:24, :] = fold8(w)


def giou_loss(pred, target, anchor, weight=None):
    """pred/target/anchor: (N, 4); weight: (N,) or None  ->  scalar f32."""
    pred = jnp.asarray(pred, jnp.float32).reshape(-1, 4)
    target = jnp.asarray(target, jnp.float32).reshape(-1, 4)
    anchor = jnp.asarray(anchor, jnp.float32).reshape(-1, 4)
    n = pred.shape[0]
    if weight is None:
        weight = jnp.zeros((n,), jnp.float32)      # -> plain-sum path
    weight = jnp.asarray(weight, jnp.float32).reshape(n)

    n_blk = min(_MAX_BLK_BOXES, _round_up(max(n, 1), _MIN_BLK_BOXES))
    n_pad = _round_up(max(n, 1), n_blk)
    num_blocks = n_pad // n_blk
    s_blk = n_blk // _LANE
    s_total = n_pad // _LANE

    # TODO(synk): ideally the producer emits component-major (4, S, 128)
    # planes directly; the transpose below costs one extra HBM pass.
    def to_planes(x):
        x = jnp.pad(x, ((0, n_pad - n), (0, 0)))
        return x.T.reshape(4, s_total, _LANE)

    pred_p = to_planes(pred)
    target_p = to_planes(target)
    anchor_p = to_planes(anchor)
    weight_p = jnp.pad(weight, (0, n_pad - n)).reshape(s_total, _LANE)

    box_spec = pl.BlockSpec((4, s_blk, _LANE), lambda i: (0, i, 0))

    partials = pl.pallas_call(
        functools.partial(_giou_partial_kernel, n, n_blk),
        out_shape=jax.ShapeDtypeStruct((num_blocks, 24, _LANE), jnp.float32),
        grid=(num_blocks,),
        in_specs=[
            box_spec,
            box_spec,
            box_spec,
            pl.BlockSpec((s_blk, _LANE), lambda i: (i, 0)),
        ],
        out_specs=pl.BlockSpec((None, 24, _LANE), lambda i: (i, 0, 0)),
        compiler_params=pltpu.CompilerParams(
            dimension_semantics=("parallel",),
            vmem_limit_bytes=32 * 1024 * 1024,
        ),
    )(pred_p, target_p, anchor_p, weight_p)

    weighted = jnp.sum(partials[:, 0:8, :])
    plain = jnp.sum(partials[:, 8:16, :])
    w_sum = jnp.sum(partials[:, 16:24, :])
    return jnp.where(w_sum > 0.0, weighted, plain)


def _giou_loss_ref(pred, target, anchor, weight):
    """Pure-JAX reference mirroring the PyTorch module."""
    def decode(d, a):
        aw = a[:, 2] - a[:, 0]
        ah = a[:, 3] - a[:, 1]
        acx = a[:, 0] + 0.5 * aw
        acy = a[:, 1] + 0.5 * ah
        cx = d[:, 0] * aw + acx
        cy = d[:, 1] * ah + acy
        bw = jnp.exp(jnp.minimum(d[:, 2], _BBOX_XFORM_CLIP)) * aw
        bh = jnp.exp(jnp.minimum(d[:, 3], _BBOX_XFORM_CLIP)) * ah
        return cx - 0.5 * bw, cy - 0.5 * bh, cx + 0.5 * bw, cy + 0.5 * bh

    px1, py1, px2, py2 = decode(pred, anchor)
    px2 = jnp.maximum(px1, px2)
    py2 = jnp.maximum(py1, py2)
    p_area = (px2 - px1) * (py2 - py1)
    tx1, ty1, tx2, ty2 = decode(target, anchor)
    t_area = (tx2 - tx1) * (ty2 - ty1)
    x1i = jnp.maximum(px1, tx1)
    y1i = jnp.maximum(py1, ty1)
    x2i = jnp.minimum(px2, tx2)
    y2i = jnp.minimum(py2, ty2)
    mask = (y2i > y1i) & (x2i > x1i)
    area_i = jnp.where(mask, (x2i - x1i) * (y2i - y1i), 0.0)
    area_e = ((jnp.maximum(px2, tx2) - jnp.minimum(px1, tx1))
              * (jnp.maximum(py2, ty2) - jnp.minimum(py1, ty1)) + 1e-7)
    area_u = p_area + t_area - area_i + 1e-7
    losses = 1.0 - (area_i / area_u - (area_e - area_u) / area_e)
    return jnp.where(jnp.sum(weight) > 0.0,
                     jnp.sum(losses * weight), jnp.sum(losses))


if __name__ == "__main__":
    key = jax.random.PRNGKey(0)
    for n in (200, 1536):   # exercises padding/masking and multi-8-sublane fold
        key, k1, k2, k3, k4, k5 = jax.random.split(key, 6)

        # Anchors: valid boxes (x2 > x1, y2 > y1).
        xy1 = jax.random.uniform(k1, (n, 2), jnp.float32, 0.0, 50.0)
        wh = jax.random.uniform(k2, (n, 2), jnp.float32, 4.0, 32.0)
        anchor = jnp.concatenate([xy1, xy1 + wh], axis=1)          # (n, 4)

        # Regression deltas (small, as produced by a localization branch).
        pred = 0.2 * jax.random.normal(k3, (n, 4), jnp.float32)
        target = 0.2 * jax.random.normal(k4, (n, 4), jnp.float32)

        # Mixup-style weights in (0, 1].
        weight = jax.random.uniform(k5, (n,), jnp.float32, 0.5, 1.0)

        loss = giou_loss(pred, target, anchor, weight)
        jax.block_until_ready(loss)
        ref = _giou_loss_ref(pred, target, anchor, weight)

        assert loss.shape == () and bool(jnp.isfinite(loss))
        # Loose tolerance: kernel uses EUP approx reciprocals.
        assert abs(float(loss) - float(ref)) <= 2e-2 * max(1.0, abs(float(ref))), (
            float(loss), float(ref))

    print("KERNEL_OK")
</pallas_src>

<mosaic_0001>
module attributes {stable_mosaic.version = 11 : i64} {
  func.func @_giou_partial_kernel(%arg0: i32, %arg1: memref<4x8x128xf32, #tpu.memory_space<vmem>>, %arg2: memref<4x8x128xf32, #tpu.memory_space<vmem>>, %arg3: memref<4x8x128xf32, #tpu.memory_space<vmem>>, %arg4: memref<8x128xf32, #tpu.memory_space<vmem>>, %arg5: memref<1x24x128xf32, #tpu.memory_space<vmem>>) attributes {dimension_semantics = [#tpu.dimension_semantics<parallel>], iteration_bounds = array<i64: 1>, scalar_prefetch = 0 : i64, scratch_operands = 0 : i64, tpu.core_type = #tpu.core_type<tc>, window_params = [{transform_indices = @transform_0, window_bounds = array<i64: 4, 8, 128>}, {transform_indices = @transform_1, window_bounds = array<i64: 4, 8, 128>}, {transform_indices = @transform_2, window_bounds = array<i64: 4, 8, 128>}, {transform_indices = @transform_3, window_bounds = array<i64: 8, 128>}, {transform_indices = @transform_4, window_bounds = array<i64: 1, 24, 128>}]} {
    %c0 = arith.constant 0 : index
    %c0_0 = arith.constant 0 : index
    %c0_1 = arith.constant 0 : index
    %0 = vector.load %arg3[%c0, %c0_0, %c0_1] : memref<4x8x128xf32, #tpu.memory_space<vmem>>, vector<4x8x128xf32>
    %1 = vector.extract_strided_slice %0 {offsets = [2, 0, 0], sizes = [1, 8, 128], strides = [1, 1, 1]} : vector<4x8x128xf32> to vector<1x8x128xf32>
    %2 = vector.shape_cast %1 : vector<1x8x128xf32> to vector<8x128xf32>
    %3 = vector.extract_strided_slice %0 {offsets = [0, 0, 0], sizes = [1, 8, 128], strides = [1, 1, 1]} : vector<4x8x128xf32> to vector<1x8x128xf32>
    %4 = vector.shape_cast %3 : vector<1x8x128xf32> to vector<8x128xf32>
    %5 = arith.subf %2, %4 : vector<8x128xf32>
    %6 = vector.extract_strided_slice %0 {offsets = [3, 0, 0], sizes = [1, 8, 128], strides = [1, 1, 1]} : vector<4x8x128xf32> to vector<1x8x128xf32>
    %7 = vector.shape_cast %6 : vector<1x8x128xf32> to vector<8x128xf32>
    %8 = vector.extract_strided_slice %0 {offsets = [1, 0, 0], sizes = [1, 8, 128], strides = [1, 1, 1]} : vector<4x8x128xf32> to vector<1x8x128xf32>
    %9 = vector.shape_cast %8 : vector<1x8x128xf32> to vector<8x128xf32>
    %10 = arith.subf %7, %9 : vector<8x128xf32>
    %11 = vector.extract_strided_slice %0 {offsets = [0, 0, 0], sizes = [1, 8, 128], strides = [1, 1, 1]} : vector<4x8x128xf32> to vector<1x8x128xf32>
    %12 = vector.shape_cast %11 : vector<1x8x128xf32> to vector<8x128xf32>
    %cst = arith.constant 5.000000e-01 : f32
    %13 = vector.broadcast %cst : f32 to vector<8x128xf32>
    %14 = arith.mulf %13, %5 : vector<8x128xf32>
    %15 = arith.addf %12, %14 : vector<8x128xf32>
    %16 = vector.extract_strided_slice %0 {offsets = [1, 0, 0], sizes = [1, 8, 128], strides = [1, 1, 1]} : vector<4x8x128xf32> to vector<1x8x128xf32>
    %17 = vector.shape_cast %16 : vector<1x8x128xf32> to vector<8x128xf32>
    %cst_2 = arith.constant 5.000000e-01 : f32
    %18 = vector.broadcast %cst_2 : f32 to vector<8x128xf32>
    %19 = arith.mulf %18, %10 : vector<8x128xf32>
    %20 = arith.addf %17, %19 : vector<8x128xf32>
    %c0_3 = arith.constant 0 : index
    %c0_4 = arith.constant 0 : index
    %c0_5 = arith.constant 0 : index
    %21 = vector.load %arg1[%c0_3, %c0_4, %c0_5] : memref<4x8x128xf32, #tpu.memory_space<vmem>>, vector<4x8x128xf32>
    %22 = vector.extract_strided_slice %21 {offsets = [0, 0, 0], sizes = [1, 8, 128], strides = [1, 1, 1]} : vector<4x8x128xf32> to vector<1x8x128xf32>
    %23 = vector.shape_cast %22 : vector<1x8x128xf32> to vector<8x128xf32>
    %24 = arith.mulf %23, %5 : vector<8x128xf32>
    %25 = arith.addf %24, %15 : vector<8x128xf32>
    %26 = vector.extract_strided_slice %21 {offsets = [1, 0, 0], sizes = [1, 8, 128], strides = [1, 1, 1]} : vector<4x8x128xf32> to vector<1x8x128xf32>
    %27 = vector.shape_cast %26 : vector<1x8x128xf32> to vector<8x128xf32>
    %28 = arith.mulf %27, %10 : vector<8x128xf32>
    %29 = arith.addf %28, %20 : vector<8x128xf32>
    %30 = vector.extract_strided_slice %21 {offsets = [2, 0, 0], sizes = [1, 8, 128], strides = [1, 1, 1]} : vector<4x8x128xf32> to vector<1x8x128xf32>
    %31 = vector.shape_cast %30 : vector<1x8x128xf32> to vector<8x128xf32>
    %cst_6 = arith.constant 4.13516665 : f32
    %32 = vector.broadcast %cst_6 : f32 to vector<8x128xf32>
    %33 = arith.minimumf %31, %32 : vector<8x128xf32>
    %34 = math.exp %33 : vector<8x128xf32>
    %35 = arith.mulf %34, %5 : vector<8x128xf32>
    %36 = vector.extract_strided_slice %21 {offsets = [3, 0, 0], sizes = [1, 8, 128], strides = [1, 1, 1]} : vector<4x8x128xf32> to vector<1x8x128xf32>
    %37 = vector.shape_cast %36 : vector<1x8x128xf32> to vector<8x128xf32>
    %cst_7 = arith.constant 4.13516665 : f32
    %38 = vector.broadcast %cst_7 : f32 to vector<8x128xf32>
    %39 = arith.minimumf %37, %38 : vector<8x128xf32>
    %40 = math.exp %39 : vector<8x128xf32>
    %41 = arith.mulf %40, %10 : vector<8x128xf32>
    %cst_8 = arith.constant 5.000000e-01 : f32
    %42 = vector.broadcast %cst_8 : f32 to vector<8x128xf32>
    %43 = arith.mulf %42, %35 : vector<8x128xf32>
    %cst_9 = arith.constant 5.000000e-01 : f32
    %44 = vector.broadcast %cst_9 : f32 to vector<8x128xf32>
    %45 = arith.mulf %44, %41 : vector<8x128xf32>
    %46 = arith.subf %25, %43 : vector<8x128xf32>
    %47 = arith.subf %29, %45 : vector<8x128xf32>
    %48 = arith.addf %25, %43 : vector<8x128xf32>
    %49 = arith.addf %29, %45 : vector<8x128xf32>
    %50 = arith.mulf %35, %41 : vector<8x128xf32>
    %c0_10 = arith.constant 0 : index
    %c0_11 = arith.constant 0 : index
    %c0_12 = arith.constant 0 : index
    %51 = vector.load %arg2[%c0_10, %c0_11, %c0_12] : memref<4x8x128xf32, #tpu.memory_space<vmem>>, vector<4x8x128xf32>
    %52 = vector.extract_strided_slice %51 {offsets = [0, 0, 0], sizes = [1, 8, 128], strides = [1, 1, 1]} : vector<4x8x128xf32> to vector<1x8x128xf32>
    %53 = vector.shape_cast %52 : vector<1x8x128xf32> to vector<8x128xf32>
    %54 = arith.mulf %53, %5 : vector<8x128xf32>
    %55 = arith.addf %54, %15 : vector<8x128xf32>
    %56 = vector.extract_strided_slice %51 {offsets = [1, 0, 0], sizes = [1, 8, 128], strides = [1, 1, 1]} : vector<4x8x128xf32> to vector<1x8x128xf32>
    %57 = vector.shape_cast %56 : vector<1x8x128xf32> to vector<8x128xf32>
    %58 = arith.mulf %57, %10 : vector<8x128xf32>
    %59 = arith.addf %58, %20 : vector<8x128xf32>
    %60 = vector.extract_strided_slice %51 {offsets = [2, 0, 0], sizes = [1, 8, 128], strides = [1, 1, 1]} : vector<4x8x128xf32> to vector<1x8x128xf32>
    %61 = vector.shape_cast %60 : vector<1x8x128xf32> to vector<8x128xf32>
    %cst_13 = arith.constant 4.13516665 : f32
    %62 = vector.broadcast %cst_13 : f32 to vector<8x128xf32>
    %63 = arith.minimumf %61, %62 : vector<8x128xf32>
    %64 = math.exp %63 : vector<8x128xf32>
    %65 = arith.mulf %64, %5 : vector<8x128xf32>
    %66 = vector.extract_strided_slice %51 {offsets = [3, 0, 0], sizes = [1, 8, 128], strides = [1, 1, 1]} : vector<4x8x128xf32> to vector<1x8x128xf32>
    %67 = vector.shape_cast %66 : vector<1x8x128xf32> to vector<8x128xf32>
    %cst_14 = arith.constant 4.13516665 : f32
    %68 = vector.broadcast %cst_14 : f32 to vector<8x128xf32>
    %69 = arith.minimumf %67, %68 : vector<8x128xf32>
    %70 = math.exp %69 : vector<8x128xf32>
    %71 = arith.mulf %70, %10 : vector<8x128xf32>
    %cst_15 = arith.constant 5.000000e-01 : f32
    %72 = vector.broadcast %cst_15 : f32 to vector<8x128xf32>
    %73 = arith.mulf %72, %65 : vector<8x128xf32>
    %cst_16 = arith.constant 5.000000e-01 : f32
    %74 = vector.broadcast %cst_16 : f32 to vector<8x128xf32>
    %75 = arith.mulf %74, %71 : vector<8x128xf32>
    %76 = arith.subf %55, %73 : vector<8x128xf32>
    %77 = arith.subf %59, %75 : vector<8x128xf32>
    %78 = arith.addf %55, %73 : vector<8x128xf32>
    %79 = arith.addf %59, %75 : vector<8x128xf32>
    %80 = arith.mulf %65, %71 : vector<8x128xf32>
    %81 = arith.minimumf %48, %78 : vector<8x128xf32>
    %82 = arith.maximumf %46, %76 : vector<8x128xf32>
    %83 = arith.subf %81, %82 : vector<8x128xf32>
    %cst_17 = arith.constant 0.000000e+00 : f32
    %84 = vector.broadcast %cst_17 : f32 to vector<8x128xf32>
    %85 = arith.maximumf %83, %84 : vector<8x128xf32>
    %86 = arith.minimumf %49, %79 : vector<8x128xf32>
    %87 = arith.maximumf %47, %77 : vector<8x128xf32>
    %88 = arith.subf %86, %87 : vector<8x128xf32>
    %cst_18 = arith.constant 0.000000e+00 : f32
    %89 = vector.broadcast %cst_18 : f32 to vector<8x128xf32>
    %90 = arith.maximumf %88, %89 : vector<8x128xf32>
    %91 = arith.mulf %85, %90 : vector<8x128xf32>
    %92 = arith.maximumf %48, %78 : vector<8x128xf32>
    %93 = arith.minimumf %46, %76 : vector<8x128xf32>
    %94 = arith.subf %92, %93 : vector<8x128xf32>
    %95 = arith.maximumf %49, %79 : vector<8x128xf32>
    %96 = arith.minimumf %47, %77 : vector<8x128xf32>
    %97 = arith.subf %95, %96 : vector<8x128xf32>
    %98 = arith.mulf %94, %97 : vector<8x128xf32>
    %cst_19 = arith.constant 1.000000e-07 : f32
    %99 = vector.broadcast %cst_19 : f32 to vector<8x128xf32>
    %100 = arith.addf %98, %99 : vector<8x128xf32>
    %101 = arith.addf %50, %80 : vector<8x128xf32>
    %102 = arith.subf %101, %91 : vector<8x128xf32>
    %cst_20 = arith.constant 1.000000e-07 : f32
    %103 = vector.broadcast %cst_20 : f32 to vector<8x128xf32>
    %104 = arith.addf %102, %103 : vector<8x128xf32>
    %105 = tpu.reciprocal %104 {approx = true} : vector<8x128xf32> -> vector<8x128xf32>
    %106 = arith.mulf %91, %105 : vector<8x128xf32>
    %cst_21 = arith.constant 2.000000e+00 : f32
    %107 = vector.broadcast %cst_21 : f32 to vector<8x128xf32>
    %108 = arith.subf %107, %106 : vector<8x128xf32>
    %109 = tpu.reciprocal %100 {approx = true} : vector<8x128xf32> -> vector<8x128xf32>
    %110 = arith.mulf %104, %109 : vector<8x128xf32>
    %111 = arith.subf %108, %110 : vector<8x128xf32>
    %c1024_i32 = arith.constant 1024 : i32
    %112 = arith.muli %arg0, %c1024_i32 : i32
    %113 = tpu.iota {dimensions = array<i32: 0>} : vector<8x128xi32>
    %114 = tpu.iota {dimensions = array<i32: 1>} : vector<8x128xi32>
    %c128_i32 = arith.constant 128 : i32
    %115 = vector.broadcast %c128_i32 : i32 to vector<8x128xi32>
    %116 = arith.muli %113, %115 : vector<8x128xi32>
    %117 = vector.broadcast %112 : i32 to vector<8x128xi32>
    %118 = arith.addi %117, %116 : vector<8x128xi32>
    %119 = arith.addi %118, %114 : vector<8x128xi32>
    %c200_i32 = arith.constant 200 : i32
    %120 = vector.broadcast %c200_i32 : i32 to vector<8x128xi32>
    %121 = arith.cmpi slt, %119, %120 : vector<8x128xi32>
    %122 = arith.extui %121 : vector<8x128xi1> to vector<8x128xi32>
    %123 = arith.sitofp %122 : vector<8x128xi32> to vector<8x128xf32>
    %c0_22 = arith.constant 0 : index
    %c0_23 = arith.constant 0 : index
    %124 = vector.load %arg4[%c0_22, %c0_23] : memref<8x128xf32, #tpu.memory_space<vmem>>, vector<8x128xf32>
    %125 = arith.mulf %124, %123 : vector<8x128xf32>
    %126 = arith.mulf %111, %123 : vector<8x128xf32>
    %127 = arith.mulf %126, %125 : vector<8x128xf32>
    %128 = vector.shape_cast %127 : vector<8x128xf32> to vector<1x8x128xf32>
    %cst_24 = arith.constant dense<0.000000e+00> : vector<8x128xf32>
    %129 = vector.multi_reduction <add>, %128, %cst_24 [0] : vector<1x8x128xf32> to vector<8x128xf32>
    %c0_25 = arith.constant 0 : index
    %c0_26 = arith.constant 0 : index
    %c0_27 = arith.constant 0 : index
    %130 = vector.load %arg5[%c0_25, %c0_26, %c0_27] : memref<1x24x128xf32, #tpu.memory_space<vmem>>, vector<1x8x128xf32>
    %131 = vector.shape_cast %130 : vector<1x8x128xf32> to vector<8x128xf32>
    %132 = vector.shape_cast %129 : vector<8x128xf32> to vector<1x8x128xf32>
    tpu.vector_store %arg5[%c0_25, %c0_26, %c0_27], %132 {strides = array<i32>} : memref<1x24x128xf32, #tpu.memory_space<vmem>>, vector<1x8x128xf32>,
    %133 = vector.shape_cast %126 : vector<8x128xf32> to vector<1x8x128xf32>
    %cst_28 = arith.constant dense<0.000000e+00> : vector<8x128xf32>
    %134 = vector.multi_reduction <add>, %133, %cst_28 [0] : vector<1x8x128xf32> to vector<8x128xf32>
    %c0_29 = arith.constant 0 : index
    %c8 = arith.constant 8 : index
    %c0_30 = arith.constant 0 : index
    %135 = vector.load %arg5[%c0_29, %c8, %c0_30] : memref<1x24x128xf32, #tpu.memory_space<vmem>>, vector<1x8x128xf32>
    %136 = vector.shape_cast %135 : vector<1x8x128xf32> to vector<8x128xf32>
    %137 = vector.shape_cast %134 : vector<8x128xf32> to vector<1x8x128xf32>
    tpu.vector_store %arg5[%c0_29, %c8, %c0_30], %137 {strides = array<i32>} : memref<1x24x128xf32, #tpu.memory_space<vmem>>, vector<1x8x128xf32>,
    %138 = vector.shape_cast %125 : vector<8x128xf32> to vector<1x8x128xf32>
    %cst_31 = arith.constant dense<0.000000e+00> : vector<8x128xf32>
    %139 = vector.multi_reduction <add>, %138, %cst_31 [0] : vector<1x8x128xf32> to vector<8x128xf32>
    %c0_32 = arith.constant 0 : index
    %c16 = arith.constant 16 : index
    %c0_33 = arith.constant 0 : index
    %140 = vector.load %arg5[%c0_32, %c16, %c0_33] : memref<1x24x128xf32, #tpu.memory_space<vmem>>, vector<1x8x128xf32>
    %141 = vector.shape_cast %140 : vector<1x8x128xf32> to vector<8x128xf32>
    %142 = vector.shape_cast %139 : vector<8x128xf32> to vector<1x8x128xf32>
    tpu.vector_store %arg5[%c0_32, %c16, %c0_33], %142 {strides = array<i32>} : memref<1x24x128xf32, #tpu.memory_space<vmem>>, vector<1x8x128xf32>,
    return
  }
  func.func @transform_0(%arg0: i32) -> (i32, i32, i32) {
    %c0_i32 = arith.constant 0 : i32
    %c0_i32_0 = arith.constant 0 : i32
    %c0_i32_1 = arith.constant 0 : i32
    return %c0_i32, %arg0, %c0_i32_0 : i32, i32, i32
  }
  func.func @transform_1(%arg0: i32) -> (i32, i32, i32) {
    %c0_i32 = arith.constant 0 : i32
    %c0_i32_0 = arith.constant 0 : i32
    %c0_i32_1 = arith.constant 0 : i32
    return %c0_i32, %arg0, %c0_i32_0 : i32, i32, i32
  }
  func.func @transform_2(%arg0: i32) -> (i32, i32, i32) {
    %c0_i32 = arith.constant 0 : i32
    %c0_i32_0 = arith.constant 0 : i32
    %c0_i32_1 = arith.constant 0 : i32
    return %c0_i32, %arg0, %c0_i32_0 : i32, i32, i32
  }
  func.func @transform_3(%arg0: i32) -> (i32, i32) {
    %c0_i32 = arith.constant 0 : i32
    %c0_i32_0 = arith.constant 0 : i32
    return %arg0, %c0_i32 : i32, i32
  }
  func.func @transform_4(%arg0: i32) -> (i32, i32, i32) {
    %c0_i32 = arith.constant 0 : i32
    %c0_i32_0 = arith.constant 0 : i32
    %c0_i32_1 = arith.constant 0 : i32
    return %arg0, %c0_i32, %c0_i32_0 : i32, i32, i32
  }
}

</mosaic_0001>

<llo_original>
// kernel: tpu_custom_call.1
$region0: #{tpu_custom_call.1}
  #allocation0 [shape = 'u32[]', space=smem, size = 0x4, offset = 0x4, fixed_abs, tag = 'smem constant byte address 0x4 - core index']
  #allocation1 [shape = 'u32[144,128]{1,0:T(1,128)}', space=vmem, size = 0x12000, scoped, tag = 'internal scratch']
  %s0 = inlined_call_operand.hbm [shape: f32[4,8,128], index: 0, kind: input, shape index: {}]
  %s1 = inlined_call_operand.hbm [shape: f32[4,8,128], index: 1, kind: input, shape index: {}]
  %s2 = inlined_call_operand.hbm [shape: f32[4,8,128], index: 2, kind: input, shape index: {}]
  %s3 = inlined_call_operand.hbm [shape: f32[8,128], index: 3, kind: input, shape index: {}]
  %s4 = inlined_call_operand.hbm [shape: f32[1,24,128], index: 4, kind: output, shape index: {}]
  %s5 = sld [smem:[#allocation0]]
  $region42: #{tpu_custom_call.1} parent=0
    _
  %s7 = ssub.s32 1, %s5
  %s8 = scalar_select 0, %s7, %s5
  $region1: #{tpu_custom_call.1} parent=0
    #allocation2 [shape = 'u8[16384]{0}', space=vmem, size = 0x4000, scoped, tag = 'input window, operand 0, single buffered']
    #allocation3 [shape = 's32[1]{0}', space=sflag, size = 0x4, scoped, tag = 'scoped memory for tpu_custom_call.1']
    #allocation4 [shape = 's32[1]{0}', space=sflag, size = 0x4, scoped, tag = 'scoped memory for tpu_custom_call.1']
    #allocation5 [shape = 'u8[16384]{0}', space=vmem, size = 0x4000, scoped, tag = 'input window, operand 1, single buffered']
    #allocation6 [shape = 's32[1]{0}', space=sflag, size = 0x4, scoped, tag = 'scoped memory for tpu_custom_call.1']
    #allocation7 [shape = 'u8[16384]{0}', space=vmem, size = 0x4000, scoped, tag = 'input window, operand 2, single buffered']
    #allocation8 [shape = 'u8[4096]{0}', space=vmem, size = 0x1000, scoped, tag = 'input window, operand 3, single buffered']
    #allocation9 [shape = 's32[1]{0}', space=sflag, size = 0x4, scoped, tag = 'scoped memory for tpu_custom_call.1']
    #allocation10 [shape = 'u8[12288]{0}', space=vmem, size = 0x3000, scoped, tag = 'output window, operand 0, single buffered']
    %9 = vsyncpa [#allocation3], 0
    %10 = vsyncpa [#allocation6], 0
    %11 = vsyncpa [#allocation9], 0
    %12 = vsyncpa [#allocation4], 0
    // Predicated region
    $region2: #{tpu_custom_call.1} parent=1 // pred_check
      _
    $region3: #{tpu_custom_call.1} parent=1 // pred_check_branch
      %14 = sbr.rel (0) target = $region5
    $region4: #{tpu_custom_call.1} parent=1 // pred_region
      %s16 = ssub.s32 512, 512
      %17 = vsyncadd [#allocation3], %s16
      %s18 = sshll.u32 [#allocation2], 4
      %s19 = int_to_ptr.vmem [resolvable:$true] %s18
      %24 = dma.hbm_to_vmem [thread:$0]  %s0, 512, %s19, [#allocation3], 128, 128, 8
    $region5: #{tpu_custom_call.1} parent=1 // pred_fallthru
      _
    // Predicated region
    $region6: #{tpu_custom_call.1} parent=1 // pred_check
      _
    $region7: #{tpu_custom_call.1} parent=1 // pred_check_branch
      %26 = sbr.rel (0) target = $region9
    $region8: #{tpu_custom_call.1} parent=1 // pred_region
      %s28 = ssub.s32 512, 512
      %29 = vsyncadd [#allocation6], %s28
      %s30 = sshll.u32 [#allocation5], 4
      %s31 = int_to_ptr.vmem [resolvable:$true] %s30
      %36 = dma.hbm_to_vmem [thread:$0]  %s1, 512, %s31, [#allocation6], 128, 128, 8
    $region9: #{tpu_custom_call.1} parent=1 // pred_fallthru
      _
    // Predicated region
    $region10: #{tpu_custom_call.1} parent=1 // pred_check
      _
    $region11: #{tpu_custom_call.1} parent=1 // pred_check_branch
      %38 = sbr.rel (0) target = $region13
    $region12: #{tpu_custom_call.1} parent=1 // pred_region
      %s40 = ssub.s32 512, 512
      %41 = vsyncadd [#allocation6], %s40
      %s42 = sshll.u32 [#allocation7], 4
      %s43 = int_to_ptr.vmem [resolvable:$true] %s42
      %48 = dma.hbm_to_vmem [thread:$0]  %s2, 512, %s43, [#allocation6], 128, 128, 8
    $region13: #{tpu_custom_call.1} parent=1 // pred_fallthru
      _
    // Predicated region
    $region14: #{tpu_custom_call.1} parent=1 // pred_check
      _
    $region15: #{tpu_custom_call.1} parent=1 // pred_check_branch
      %50 = sbr.rel (0) target = $region17
    $region16: #{tpu_custom_call.1} parent=1 // pred_region
      %s52 = ssub.s32 128, 128
      %53 = vsyncadd [#allocation9], %s52
      %s55 = sshll.u32 [#allocation8], 4
      %s56 = int_to_ptr.vmem [resolvable:$true] %s55
      %58 = dma.hbm_to_vmem [thread:$0]  %s3, 128, %s56, [#allocation9]
    $region17: #{tpu_custom_call.1} parent=1 // pred_fallthru
      _
    // Predicated region
    $region18: #{tpu_custom_call.1} parent=1 // pred_check
      _
    $region19: #{tpu_custom_call.1} parent=1 // pred_check_branch
      %60 = sbr.rel (0) target = $region21
    $region20: #{tpu_custom_call.1} parent=1 // pred_region
      %61 = dma.done [#allocation3], 512
    $region21: #{tpu_custom_call.1} parent=1 // pred_fallthru
      _
    // Predicated region
    $region22: #{tpu_custom_call.1} parent=1 // pred_check
      _
    $region23: #{tpu_custom_call.1} parent=1 // pred_check_branch
      %63 = sbr.rel (0) target = $region25
    $region24: #{tpu_custom_call.1} parent=1 // pred_region
      %64 = dma.done [#allocation6], 512
    $region25: #{tpu_custom_call.1} parent=1 // pred_fallthru
      _
    // Predicated region
    $region26: #{tpu_custom_call.1} parent=1 // pred_check
      _
    $region27: #{tpu_custom_call.1} parent=1 // pred_check_branch
      %66 = sbr.rel (0) target = $region29
    $region28: #{tpu_custom_call.1} parent=1 // pred_region
      %67 = dma.done [#allocation6], 512
    $region29: #{tpu_custom_call.1} parent=1 // pred_fallthru
      _
    // Predicated region
    $region30: #{tpu_custom_call.1} parent=1 // pred_check
      _
    $region31: #{tpu_custom_call.1} parent=1 // pred_check_branch
      %69 = sbr.rel (0) target = $region33
    $region32: #{tpu_custom_call.1} parent=1 // pred_region
      %70 = dma.done [#allocation9], 128
    $region33: #{tpu_custom_call.1} parent=1 // pred_fallthru
      _
    %v71 = vld [vmem:[#allocation7] sm:$0xff]
    %v72 = vld [vmem:[#allocation7 + $0x8] sm:$0xff]
    %v73 = vld [vmem:[#allocation7 + $0x10] sm:$0xff]
    %v74 = vld [vmem:[#allocation7 + $0x18] sm:$0xff]
    %v75 = vsub.f32 %v73, %v71
    %v76 = vsub.f32 %v74, %v72
    %v77 = vmul.f32 %v75, 0.5
    %v78 = vadd.f32 %v71, %v77
    %v79 = vmul.f32 %v76, 0.5
    %v80 = vadd.f32 %v72, %v79
    %v81 = vld [vmem:[#allocation2] sm:$0xff]
    %v82 = vld [vmem:[#allocation2 + $0x8] sm:$0xff]
    %v83 = vld [vmem:[#allocation2 + $0x10] sm:$0xff]
    %v84 = vld [vmem:[#allocation2 + $0x18] sm:$0xff]
    %v85 = vmul.f32 %v81, %v75
    %v86 = vadd.f32 %v85, %v78
    %v87 = vmul.f32 %v82, %v76
    %v88 = vadd.f32 %v87, %v80
    %v89 = vmin.f32 %v83, 4.1351666
    %v90 = vmul.f32 %v89, 1.442695
    %v91 = vpow.pop %v90
    %v92 = vmul.f32 %v91, %v75
    %v93 = vmin.f32 %v84, 4.1351666
    %v94 = vmul.f32 %v93, 1.442695
    %v95 = vpow.pop %v94
    %v96 = vmul.f32 %v95, %v76
    %v97 = vmul.f32 %v92, 0.5
    %v98 = vmul.f32 %v96, 0.5
    %v99 = vsub.f32 %v86, %v97
    %v100 = vsub.f32 %v88, %v98
    %v101 = vadd.f32 %v86, %v97
    %v102 = vadd.f32 %v88, %v98
    %v103 = vmul.f32 %v92, %v96
    %v104 = vld [vmem:[#allocation5] sm:$0xff]
    %v105 = vld [vmem:[#allocation5 + $0x8] sm:$0xff]
    %v106 = vld [vmem:[#allocation5 + $0x10] sm:$0xff]
    %v107 = vld [vmem:[#allocation5 + $0x18] sm:$0xff]
    %v108 = vmul.f32 %v104, %v75
    %v109 = vadd.f32 %v108, %v78
    %v110 = vmul.f32 %v105, %v76
    %v111 = vadd.f32 %v110, %v80
    %v112 = vmin.f32 %v106, 4.1351666
    %v113 = vmul.f32 %v112, 1.442695
    %v114 = vpow.pop %v113
    %v115 = vmul.f32 %v114, %v75
    %v116 = vmin.f32 %v107, 4.1351666
    %v117 = vmul.f32 %v116, 1.442695
    %v118 = vpow.pop %v117
    %v119 = vmul.f32 %v118, %v76
    %v120 = vmul.f32 %v115, 0.5
    %v121 = vmul.f32 %v119, 0.5
    %v122 = vsub.f32 %v109, %v120
    %v123 = vsub.f32 %v111, %v121
    %v124 = vadd.f32 %v109, %v120
    %v125 = vadd.f32 %v111, %v121
    %v126 = vmul.f32 %v115, %v119
    %v127 = vmin.f32 %v101, %v124
    %v128 = vmax.f32 %v99, %v122
    %v129 = vsub.f32 %v127, %v128
    %v130 = vmax.f32 %v129, 0.0
    %v131 = vmin.f32 %v102, %v125
    %v132 = vmax.f32 %v100, %v123
    %v133 = vsub.f32 %v131, %v132
    %v134 = vmax.f32 %v133, 0.0
    %v135 = vmul.f32 %v130, %v134
    %v136 = vmax.f32 %v101, %v124
    %v137 = vmin.f32 %v99, %v122
    %v138 = vsub.f32 %v136, %v137
    %v139 = vmax.f32 %v102, %v125
    %v140 = vmin.f32 %v100, %v123
    %v141 = vsub.f32 %v139, %v140
    %v142 = vmul.f32 %v138, %v141
    %v143 = vadd.f32 %v142, 1e-07
    %v144 = vadd.f32 %v103, %v126
    %v145 = vsub.f32 %v144, %v135
    %v146 = vadd.f32 %v145, 1e-07
    %v147 = vrcp.pop %v146
    %v148 = vmul.f32 %v135, %v147
    %v149 = vsub.f32 2.0, %v148
    %v150 = vrcp.pop %v143
    %v151 = vmul.f32 %v146, %v150
    %v152 = vsub.f32 %v149, %v151
    %s153 = smul.u32 0, 1024
    %v154 = vlaneseq
    %v155 = vshrl.u32 %v154, 7
    %v156 = vlaneseq
    %v157 = vand.u32 %v156, 127
    %v158 = vmul.u32 %v155, 128
    %v159 = vstv %s153
    %v160 = vadd.s32 %v159, %v158
    %v161 = vadd.s32 %v160, %v157
    %vm162 = vcmp.lt.s32.totalorder %v161, 200
    %v163 = vsel %vm162, 1, 0
    %v164 = vcvt.s32.f32 %v163
    %v165 = vld [vmem:[#allocation8] sm:$0xff]
    %v166 = vmul.f32 %v165, %v164
    %v167 = vmul.f32 %v152, %v164
    %v168 = vmul.f32 %v167, %v166
    %v169 = vadd.f32 %v168, 0.0
    %170 = vst [vmem:[#allocation10] sm:$0xff] %v169
    %v171 = vadd.f32 %v167, 0.0
    %172 = vst [vmem:[#allocation10 + $0x8] sm:$0xff] %v171
    %v173 = vadd.f32 %v166, 0.0
    %174 = vst [vmem:[#allocation10 + $0x10] sm:$0xff] %v173
    // Predicated region
    $region34: #{tpu_custom_call.1} parent=1 // pred_check
      _
    $region35: #{tpu_custom_call.1} parent=1 // pred_check_branch
      %176 = sbr.rel (0) target = $region37
    $region36: #{tpu_custom_call.1} parent=1 // pred_region
      %s178 = ssub.s32 384, 384
      %179 = vsyncadd [#allocation4], %s178
      %s180 = sshll.u32 [#allocation10], 4
      %s181 = int_to_ptr.vmem [resolvable:$true] %s180
      %186 = dma.vmem_to_hbm [thread:$0]  %s181, 384, %s4, [#allocation4], 128, 128, 8
    $region37: #{tpu_custom_call.1} parent=1 // pred_fallthru
      _
    // Predicated region
    $region38: #{tpu_custom_call.1} parent=1 // pred_check
      _
    $region39: #{tpu_custom_call.1} parent=1 // pred_check_branch
      %188 = sbr.rel (0) target = $region41
    $region40: #{tpu_custom_call.1} parent=1 // pred_region
      %189 = dma.done [#allocation4], 384
    $region41: #{tpu_custom_call.1} parent=1 // pred_fallthru
      _
    %190 = vsyncpa [#allocation3], 1
    %191 = vsyncpa [#allocation6], 1
    %192 = vsyncpa [#allocation9], 1
    %193 = vsyncpa [#allocation4], 1

</llo_original>
